<compile_context>
chip_gen: v7x
topology: tpu7x:2x2x1
jax: 0.10.0
libtpu: 0.0.40
codegen_flags: <defaults>
</compile_context>

<pallas_src>
import functools
from itertools import combinations

import jax
import jax.numpy as jnp
from jax.experimental import pallas as pl
from jax.experimental.pallas import tpu as pltpu


def _margin_rank_kernel(score_ref, out_ref, *, n_pos, margin, bsz, tb, mask_rows):
    """One grid step: partial hinge sum of a (tb, list_len) batch tile."""
    b = pl.program_id(0)

    s = score_ref[...].astype(jnp.float32)            # hinge math in f32
    tile_rows, list_len = s.shape

    # (1, list_len) column-index vector; broadcast against the tile inside the select.
    col = jax.lax.broadcasted_iota(jnp.int32, (1, list_len), 1)

    acc = jnp.zeros((tile_rows, list_len), jnp.float32)
    # n_pos is a small static hyperparameter -> fully unrolled VPU-only loop.
    for i in range(n_pos):
        si = s[:, i:i + 1]                            # (tile_rows, 1) column i
        if margin != 0.0:
            si = si - margin                          # fold margin into the (tile,1) scalar
        hinge = jnp.maximum(s - si, 0.0)              # relu(s_j - s_i + margin)
        acc = acc + jnp.where(col > i, hinge, 0.0)    # keep only pairs with j > i

    if mask_rows:
        # Drop padded batch rows of the ragged last tile; jnp.where is a true
        # select, so any NaN garbage in the padding is removed before the reduce.
        row = jax.lax.broadcasted_iota(jnp.int32, (tile_rows, 1), 0) + b * tb
        acc = jnp.where(row < bsz, acc, 0.0)

    # One cross-lane reduce per batch tile; broadcast the partial into the
    # (8,128)-aligned output block (the wrapper reads element [b, 0, 0]).
    out_ref[...] = jnp.full(out_ref.shape, jnp.sum(acc), dtype=jnp.float32)


def _sublane(itemsize):
    # Sublane packing of the input dtype: 8 for f32, 16 for bf16, 32 for int8/fp8.
    return max(8, 32 // max(1, itemsize))


def _vmem_limit_bytes():
    # Per-chip scoped-VMEM limit: ~64 MiB on the 128 MiB parts (v5e/v6e),
    # ~48 MiB on v7x's 64 MiB VMEM.
    try:
        cap = int(pltpu.get_tpu_info().vmem_capacity_bytes)
    except Exception:
        cap = 64 * 1024 * 1024
    return int(min(64 * 1024 * 1024, (cap * 3) // 4))


def _pick_batch_tile(bsz, list_len, itemsize, tile_budget, block_bsz=None):
    """Pick a batch-tile size sized against the true in-kernel footprint."""
    sub = _sublane(itemsize)
    if block_bsz is not None:
        tb = int(block_bsz)
        assert tb == bsz or tb % sub == 0, (
            "block_bsz must be bsz or a multiple of the dtype's sublane packing")
    else:
        # Per-row footprint: 2x double-buffered input tile (input dtype) plus
        # ~4 live full-tile f32 intermediates (s cast, acc, hinge, select tmp).
        bytes_per_row = 2 * list_len * itemsize + 4 * list_len * 4
        max_rows = max(sub, tile_budget // max(1, bytes_per_row))
        if bsz <= max_rows:
            return bsz, 1
        tb = max(sub, (min(max_rows, bsz) // sub) * sub)
    nbt = -(-bsz // tb)
    return tb, nbt


def margin_rank_loss(tgt_score, score, *, n_pos, margin=0.0, block_bsz=None):
    """Pallas implementation of MarginRank.forward (tgt_score unused, as in the reference)."""
    del tgt_score  # unused by the reference forward
    bsz, list_len = score.shape
    target_num = int(n_pos * (list_len - (1 + n_pos) / 2))
    assert target_num >= 1, "MarginRank: n_pos must be >= 1 (target_num == 0 -> undefined mean)"

    # Compile-time structural check: the first `target_num` pairs emitted by
    # combinations(range(list_len), 2) are exactly {(i, j): i < n_pos, i < j}.
    pairs = list(combinations(range(list_len), 2))[:target_num]
    expected = [(i, j) for i in range(n_pos) for j in range(i + 1, list_len)]
    assert pairs == expected, "MarginRank: pair-structure assumption violated (n_pos >= list_len?)"

    itemsize = jnp.dtype(score.dtype).itemsize
    vmem_limit = _vmem_limit_bytes()
    tile_budget = (vmem_limit * 2) // 3              # headroom for control/layout slack
    tb, nbt = _pick_batch_tile(bsz, list_len, itemsize, tile_budget, block_bsz)

    kernel = functools.partial(
        _margin_rank_kernel,
        n_pos=int(n_pos),
        margin=float(margin),
        bsz=bsz,
        tb=tb,
        mask_rows=(bsz % tb) != 0,
    )

    cost = pl.CostEstimate(
        flops=6 * int(n_pos) * bsz * list_len,
        transcendentals=0,
        bytes_accessed=bsz * list_len * itemsize + nbt * 8 * 128 * 4,
    )

    # TODO(synk): if n_pos grows enough that the VALU slot (not HBM / per-step
    # overhead) binds, repack (bsz, list_len) -> (bsz//r, r*list_len) lanes and
    # use pltpu.roll-based column broadcasts; and run the hinge math in bf16 on
    # v6e/v7x (bf16 VALU).  Kept f32/unpacked here for v5e portability.
    partials = pl.pallas_call(
        kernel,
        out_shape=jax.ShapeDtypeStruct((nbt, 8, 128), jnp.float32),
        grid=(nbt,),
        in_specs=[pl.BlockSpec((tb, list_len), lambda b: (b, 0))],
        out_specs=pl.BlockSpec((1, 8, 128), lambda b: (b, 0, 0)),
        compiler_params=pltpu.CompilerParams(
            dimension_semantics=("parallel",),       # per-step partials -> v7x megacore-shardable
            vmem_limit_bytes=vmem_limit,
        ),
        cost_estimate=cost,
    )(score)

    # Tiny final reduce + single 1/denom scale outside the kernel.
    inv_denom = 1.0 / float(bsz * target_num)
    return jnp.sum(partials[:, 0, 0]) * inv_denom


def _reference_loss(score, *, n_pos, margin=0.0):
    # Pure-JAX mirror of the PyTorch reference (gather-based).
    bsz, list_len = score.shape
    target_num = int(n_pos * (list_len - (1 + n_pos) / 2))
    pairs = list(combinations(range(list_len), 2))[:target_num]
    idx_i = jnp.asarray([p[0] for p in pairs], dtype=jnp.int32)
    idx_j = jnp.asarray([p[1] for p in pairs], dtype=jnp.int32)
    si = score[:, idx_i].astype(jnp.float32)
    sj = score[:, idx_j].astype(jnp.float32)
    return jnp.mean(jnp.maximum(sj - si + margin, 0.0))


if __name__ == "__main__":
    key = jax.random.PRNGKey(0)
    configs = [
        dict(bsz=2, list_len=8, n_pos=2, margin=0.0, block_bsz=None),
        dict(bsz=4, list_len=16, n_pos=3, margin=0.1, block_bsz=None),
        # Forces a multi-step grid (nbt=3) with a ragged last tile -> exercises
        # the per-step partial-sum outputs and the padded-row masking.
        dict(bsz=20, list_len=16, n_pos=3, margin=0.05, block_bsz=8),
    ]
    for cfg in configs:
        key, k1, k2 = jax.random.split(key, 3)
        shape = (cfg["bsz"], cfg["list_len"])
        tgt_score = jax.random.normal(k1, shape, dtype=jnp.float32)  # unused by forward
        score = jax.random.normal(k2, shape, dtype=jnp.float32)

        loss = margin_rank_loss(tgt_score, score, n_pos=cfg["n_pos"],
                                margin=cfg["margin"], block_bsz=cfg["block_bsz"])
        loss = jax.block_until_ready(loss)

        ref = _reference_loss(score, n_pos=cfg["n_pos"], margin=cfg["margin"])
        assert jnp.allclose(loss, ref, atol=1e-5, rtol=1e-5), (cfg, loss, ref)

    print("KERNEL_OK")
</pallas_src>

<mosaic_0001>
module attributes {stable_mosaic.version = 11 : i64} {
  func.func @_margin_rank_kernel(%arg0: i32, %arg1: memref<2x8xf32, #tpu.memory_space<vmem>>, %arg2: memref<1x8x128xf32, #tpu.memory_space<vmem>>) attributes {dimension_semantics = [#tpu.dimension_semantics<parallel>], iteration_bounds = array<i64: 1>, scalar_prefetch = 0 : i64, scratch_operands = 0 : i64, tpu.core_type = #tpu.core_type<tc>, window_params = [{transform_indices = @transform_0, window_bounds = array<i64: 2, 8>}, {transform_indices = @transform_1, window_bounds = array<i64: 1, 8, 128>}]} {
    %c0 = arith.constant 0 : index
    %c0_0 = arith.constant 0 : index
    %0 = vector.load %arg1[%c0, %c0_0] : memref<2x8xf32, #tpu.memory_space<vmem>>, vector<2x8xf32>
    %1 = tpu.iota {dimensions = array<i32: 1>} : vector<1x8xi32>
    %cst = arith.constant 0.000000e+00 : f32
    %2 = vector.broadcast %cst : f32 to vector<2x8xf32>
    %3 = vector.extract_strided_slice %0 {offsets = [0, 0], sizes = [2, 1], strides = [1, 1]} : vector<2x8xf32> to vector<2x1xf32>
    %4 = vector.broadcast %3 : vector<2x1xf32> to vector<2x8xf32>
    %5 = arith.subf %0, %4 : vector<2x8xf32>
    %cst_1 = arith.constant 0.000000e+00 : f32
    %6 = vector.broadcast %cst_1 : f32 to vector<2x8xf32>
    %7 = arith.maximumf %5, %6 : vector<2x8xf32>
    %c0_i32 = arith.constant 0 : i32
    %8 = vector.broadcast %c0_i32 : i32 to vector<1x8xi32>
    %9 = arith.cmpi sgt, %1, %8 : vector<1x8xi32>
    %cst_2 = arith.constant 0.000000e+00 : f32
    %10 = vector.shape_cast %9 : vector<1x8xi1> to vector<1x8xi1>
    %11 = vector.broadcast %10 : vector<1x8xi1> to vector<2x8xi1>
    %12 = vector.broadcast %cst_2 : f32 to vector<2x8xf32>
    %13 = arith.select %11, %7, %12 : vector<2x8xi1>, vector<2x8xf32>
    %14 = arith.addf %2, %13 : vector<2x8xf32>
    %15 = vector.extract_strided_slice %0 {offsets = [0, 1], sizes = [2, 1], strides = [1, 1]} : vector<2x8xf32> to vector<2x1xf32>
    %16 = vector.broadcast %15 : vector<2x1xf32> to vector<2x8xf32>
    %17 = arith.subf %0, %16 : vector<2x8xf32>
    %cst_3 = arith.constant 0.000000e+00 : f32
    %18 = vector.broadcast %cst_3 : f32 to vector<2x8xf32>
    %19 = arith.maximumf %17, %18 : vector<2x8xf32>
    %c1_i32 = arith.constant 1 : i32
    %20 = vector.broadcast %c1_i32 : i32 to vector<1x8xi32>
    %21 = arith.cmpi sgt, %1, %20 : vector<1x8xi32>
    %cst_4 = arith.constant 0.000000e+00 : f32
    %22 = vector.shape_cast %21 : vector<1x8xi1> to vector<1x8xi1>
    %23 = vector.broadcast %22 : vector<1x8xi1> to vector<2x8xi1>
    %24 = vector.broadcast %cst_4 : f32 to vector<2x8xf32>
    %25 = arith.select %23, %19, %24 : vector<2x8xi1>, vector<2x8xf32>
    %26 = arith.addf %14, %25 : vector<2x8xf32>
    %27 = vector.shape_cast %26 : vector<2x8xf32> to vector<1x2x8xf32>
    %cst_5 = arith.constant dense<0.000000e+00> : vector<1xf32>
    %28 = vector.multi_reduction <add>, %27, %cst_5 [1, 2] : vector<1x2x8xf32> to vector<1xf32>
    %29 = vector.shape_cast %28 : vector<1xf32> to vector<1x1x1xf32>
    %30 = vector.extract %29[0, 0, 0] : f32 from vector<1x1x1xf32>
    %31 = vector.broadcast %30 : f32 to vector<1x8x128xf32>
    %c0_6 = arith.constant 0 : index
    %c0_7 = arith.constant 0 : index
    %c0_8 = arith.constant 0 : index
    %32 = vector.load %arg2[%c0_6, %c0_7, %c0_8] : memref<1x8x128xf32, #tpu.memory_space<vmem>>, vector<1x8x128xf32>
    tpu.vector_store %arg2[%c0_6, %c0_7, %c0_8], %31 {strides = array<i32>} : memref<1x8x128xf32, #tpu.memory_space<vmem>>, vector<1x8x128xf32>,
    return
  }
  func.func @transform_0(%arg0: i32) -> (i32, i32) {
    %c0_i32 = arith.constant 0 : i32
    %c0_i32_0 = arith.constant 0 : i32
    return %arg0, %c0_i32 : i32, i32
  }
  func.func @transform_1(%arg0: i32) -> (i32, i32, i32) {
    %c0_i32 = arith.constant 0 : i32
    %c0_i32_0 = arith.constant 0 : i32
    %c0_i32_1 = arith.constant 0 : i32
    return %arg0, %c0_i32, %c0_i32_0 : i32, i32, i32
  }
}

</mosaic_0001>

<llo_original>
// kernel: tpu_custom_call.1
$region0: #{tpu_custom_call.1}
  #allocation0 [shape = 'u32[]', space=smem, size = 0x4, offset = 0x4, fixed_abs, tag = 'smem constant byte address 0x4 - core index']
  #allocation1 [shape = 'u32[144,128]{1,0:T(1,128)}', space=vmem, size = 0x12000, scoped, tag = 'internal scratch']
  %s0 = inlined_call_operand.hbm [shape: f32[2,8], index: 0, kind: input, shape index: {}]
  %s1 = inlined_call_operand.hbm [shape: f32[1,8,128], index: 1, kind: output, shape index: {}]
  %s2 = sld [smem:[#allocation0]]
  $region18: #{tpu_custom_call.1} parent=0
    _
  %s4 = ssub.s32 1, %s2
  %s5 = scalar_select 0, %s4, %s2
  $region1: #{tpu_custom_call.1} parent=0
    #allocation2 [shape = 'u8[1024]{0}', space=vmem, size = 0x400, scoped, tag = 'input window, operand 0, single buffered']
    #allocation3 [shape = 's32[1]{0}', space=sflag, size = 0x4, scoped, tag = 'scoped memory for tpu_custom_call.1']
    #allocation4 [shape = 's32[1]{0}', space=sflag, size = 0x4, scoped, tag = 'scoped memory for tpu_custom_call.1']
    #allocation5 [shape = 'u8[4096]{0}', space=vmem, size = 0x1000, scoped, tag = 'output window, operand 0, single buffered']
    %6 = vsyncpa [#allocation3], 0
    %7 = vsyncpa [#allocation4], 0
    // Predicated region
    $region2: #{tpu_custom_call.1} parent=1 // pred_check
      _
    $region3: #{tpu_custom_call.1} parent=1 // pred_check_branch
      %9 = sbr.rel (0) target = $region5
    $region4: #{tpu_custom_call.1} parent=1 // pred_region
      %s11 = ssub.s32 32, 32
      %12 = vsyncadd [#allocation3], %s11
      %s14 = sshll.u32 [#allocation2], 4
      %s15 = int_to_ptr.vmem [resolvable:$true] %s14
      %17 = dma.hbm_to_vmem [thread:$0]  %s0, 32, %s15, [#allocation3]
    $region5: #{tpu_custom_call.1} parent=1 // pred_fallthru
      _
    // Predicated region
    $region6: #{tpu_custom_call.1} parent=1 // pred_check
      _
    $region7: #{tpu_custom_call.1} parent=1 // pred_check_branch
      %19 = sbr.rel (0) target = $region9
    $region8: #{tpu_custom_call.1} parent=1 // pred_region
      %20 = dma.done [#allocation3], 32
    $region9: #{tpu_custom_call.1} parent=1 // pred_fallthru
      _
    %v21 = vld [vmem:[#allocation2] sm:$0x3]
    %v22 = vlaneseq
    %v23 = vand.u32 %v22, 127
    %25 = vset.pattern.permute.xlu0 0
    %26 = vperm.xlu0 %25, %v21
    %v27 = vpop.permute.xlu0 %26
    %v29 = vsub.f32 %v21, %v27
    %v30 = vmax.f32 %v29, 0.0
    %vm31 = vcmp.gt.s32.totalorder %v23, 0
    %v32 = vsel %vm31, 1, 0
    %vm33 = vcmp.eq.s32.totalorder %v32, 1
    %v34 = vsel %vm33, %v30, 0.0
    %v35 = vadd.f32 %v34, 0.0
    %36 = vset.pattern.permute.xlu0 1
    %37 = vperm.xlu0 %36, %v21
    %v38 = vpop.permute.xlu0 %37
    %v40 = vsub.f32 %v21, %v38
    %v41 = vmax.f32 %v40, 0.0
    %vm42 = vcmp.gt.s32.totalorder %v23, 1
    %v43 = vsel %vm42, 1, 0
    %vm44 = vcmp.eq.s32.totalorder %v43, 1
    %v45 = vsel %vm44, %v41, 0.0
    %v46 = vadd.f32 %v35, %v45
    %vm47 = vcmask 58368
    %v48 = vsel %vm47, %v46, 0.0
    %49 = vadd.xlane.f32.xlu0 %v48
    %v50 = vpop.xlane.xlu0 %49
    %v51 = vrot.slane %v50, 4
    %v52 = vadd.f32 %v50, %v51
    %v53 = vrot.slane %v52, 2
    %v54 = vadd.f32 %v52, %v53
    %v55 = vrot.slane %v54, 1
    %v56 = vadd.f32 %v54, %v55
    %s57 = vtos %v56
    %v58 = vstv %s57
    %59 = vst [vmem:[#allocation5] sm:$0xff] %v58
    // Predicated region
    $region10: #{tpu_custom_call.1} parent=1 // pred_check
      _
    $region11: #{tpu_custom_call.1} parent=1 // pred_check_branch
      %61 = sbr.rel (0) target = $region13
    $region12: #{tpu_custom_call.1} parent=1 // pred_region
      %s63 = ssub.s32 128, 128
      %64 = vsyncadd [#allocation4], %s63
      %s66 = sshll.u32 [#allocation5], 4
      %s67 = int_to_ptr.vmem [resolvable:$true] %s66
      %69 = dma.vmem_to_hbm [thread:$0]  %s67, 128, %s1, [#allocation4]
    $region13: #{tpu_custom_call.1} parent=1 // pred_fallthru
      _
    // Predicated region
    $region14: #{tpu_custom_call.1} parent=1 // pred_check
      _
    $region15: #{tpu_custom_call.1} parent=1 // pred_check_branch
      %71 = sbr.rel (0) target = $region17
    $region16: #{tpu_custom_call.1} parent=1 // pred_region
      %72 = dma.done [#allocation4], 128
    $region17: #{tpu_custom_call.1} parent=1 // pred_fallthru
      _
    %73 = vsyncpa [#allocation3], 1
    %74 = vsyncpa [#allocation4], 1

</llo_original>
